<compile_context>
chip_gen: v7x
topology: tpu7x:2x2x1
jax: 0.10.0
libtpu: 0.0.40
codegen_flags: <defaults>
</compile_context>

<pallas_src>
import functools

import jax
import jax.numpy as jnp
from jax.experimental import pallas as pl
from jax.experimental.pallas import tpu as pltpu


def _round_up(n: int, m: int) -> int:
    return ((n + m - 1) // m) * m


# ----------------------------------------------------------------------------
# Pallas kernel: fused  relu(x @ W1 + b1) @ W2 + b2  for one batch tile.
# ----------------------------------------------------------------------------
def _mlp_kernel(x_ref, w1_ref, b1_ref, w2_ref, b2_ref, o_ref):
    # x arrives unpadded (K = in_dim) in the caller's dtype; cast to bf16 in
    # VMEM so HBM activation traffic stays at its original width.
    x = x_ref[...].astype(w1_ref.dtype)          # (TM, K)  bf16
    b1 = b1_ref[...]                              # (1, Hp)  f32 (hoisted)
    b2 = b2_ref[...]                              # (1, Np)  f32
    # bf16 operands on the MXU, f32 accumulation, f32 epilogue.
    h = jnp.dot(x, w1_ref[...], preferred_element_type=jnp.float32) + b1
    h = jnp.maximum(h, 0.0)                       # ReLU in f32 (v5e-safe)
    h = h.astype(w2_ref.dtype)                    # bf16 for the second MXU pass
    y = jnp.dot(h, w2_ref[...], preferred_element_type=jnp.float32) + b2
    o_ref[...] = y.astype(o_ref.dtype)            # bf16 store: half the bytes


# ----------------------------------------------------------------------------
# Jitted wrapper: batch tiling + pallas_call + padding slice-off.
# Weights/biases arrive already padded/cast (done once at model build time).
# ----------------------------------------------------------------------------
@functools.partial(jax.jit, static_argnames=("out_dim", "block_batch"))
def mlp_forward(x, w1_p, b1_p, w2_p, b2_p, *, out_dim, block_batch=512):
    batch, in_dim = x.shape
    hid_p = w1_p.shape[1]
    out_p = w2_p.shape[1]

    # Batch tile: multiple of 16 (bf16 sublane packing); large default so the
    # per-grid-step overhead amortizes; capped at half the padded batch when
    # batch >= 32 so v7x's two TensorCores both get a grid step.
    tm = min(block_batch, _round_up(batch, 16))
    if batch >= 32:
        tm = min(tm, _round_up(batch, 32) // 2)
    batch_p = _round_up(batch, tm)
    if batch_p != batch:
        x = jnp.pad(x, ((0, batch_p - batch), (0, 0)))

    grid = (batch_p // tm,)
    y_p = pl.pallas_call(
        _mlp_kernel,
        out_shape=jax.ShapeDtypeStruct((batch_p, out_p), jnp.bfloat16),
        grid_spec=pltpu.PrefetchScalarGridSpec(
            num_scalar_prefetch=0,
            grid=grid,
            in_specs=[
                # activations: tiled over batch -> pipelined, double-buffered.
                # Trailing block dim == full array dim, so no feature padding.
                pl.BlockSpec((tm, in_dim), lambda i: (i, 0)),
                # weights / biases: constant block index -> resident in VMEM.
                pl.BlockSpec((w1_p.shape[0], hid_p), lambda i: (0, 0)),
                pl.BlockSpec((1, hid_p), lambda i: (0, 0)),
                pl.BlockSpec((hid_p, out_p), lambda i: (0, 0)),
                pl.BlockSpec((1, out_p), lambda i: (0, 0)),
            ],
            out_specs=pl.BlockSpec((tm, out_p), lambda i: (i, 0)),
        ),
        compiler_params=pltpu.CompilerParams(
            # independent batch tiles -> megacore sharding on v7x, free on
            # v5e/v6e (single TC).
            dimension_semantics=("parallel",),
        ),
    )(x, w1_p, b1_p, w2_p, b2_p)
    # Slice off batch / lane padding inside the same jit so it fuses.
    return y_p[:batch, :out_dim]


# ----------------------------------------------------------------------------
# Wrapped model: tiny MLP exposing a non-forward method (`predict`).
# Padding / bf16 casting of parameters happens ONCE, here.
# ----------------------------------------------------------------------------
class TinyMLP:
    def __init__(self, key, in_dim=32, hidden_dim=32, out_dim=32,
                 dtype=jnp.float32):
        k1, k2, k3, k4 = jax.random.split(key, 4)
        scale1 = 1.0 / jnp.sqrt(in_dim)
        scale2 = 1.0 / jnp.sqrt(hidden_dim)
        # "True" f32 parameters (weights stored [in, out] = PyTorch weight.T).
        self.w1 = jax.random.uniform(k1, (in_dim, hidden_dim), dtype, -1, 1) * scale1
        self.b1 = jax.random.uniform(k2, (1, hidden_dim), dtype, -1, 1) * scale1
        self.w2 = jax.random.uniform(k3, (hidden_dim, out_dim), dtype, -1, 1) * scale2
        self.b2 = jax.random.uniform(k4, (1, out_dim), dtype, -1, 1) * scale2

        self.in_dim, self.hidden_dim, self.out_dim = in_dim, hidden_dim, out_dim

        # One-time prep: lane-pad feature dims to 128 and cast matmul operands
        # to bf16 (padded columns/rows are zero, so padded lanes stay inert).
        hid_p = _round_up(hidden_dim, 128)
        out_p = _round_up(out_dim, 128)
        mx = jnp.bfloat16
        self.w1_p = jnp.zeros((in_dim, hid_p), mx).at[:, :hidden_dim].set(
            self.w1.astype(mx))
        self.b1_p = jnp.zeros((1, hid_p), jnp.float32).at[:, :hidden_dim].set(
            self.b1.astype(jnp.float32))
        self.w2_p = jnp.zeros((hid_p, out_p), mx).at[:hidden_dim, :out_dim].set(
            self.w2.astype(mx))
        self.b2_p = jnp.zeros((1, out_p), jnp.float32).at[:, :out_dim].set(
            self.b2.astype(jnp.float32))

    def _run(self, x):
        # Output is bf16 (kernel stores bf16 to halve writeback); cast to f32
        # in the caller only if strictly required.
        return mlp_forward(x, self.w1_p, self.b1_p, self.w2_p, self.b2_p,
                           out_dim=self.out_dim)

    def forward(self, x):
        return self._run(x)

    def predict(self, x):
        # the "specified method" that _ForwardOverrideModel routes to
        return self._run(x)


# ----------------------------------------------------------------------------
# _ForwardOverrideModel equivalent: forward() dispatches to the named method.
# ----------------------------------------------------------------------------
class ForwardOverrideModel:
    """Model that calls the specified method instead of forward."""

    def __init__(self, model, method_name):
        self.model = model
        self.method_name = method_name

    def forward(self, *args, **kwargs):
        # TODO(synk): getattr dispatch is Python-level control flow; it has no
        # in-kernel equivalent and is resolved here at trace time.
        return getattr(self.model, self.method_name)(*args, **kwargs)

    __call__ = forward


# ----------------------------------------------------------------------------
# Reference (pure JAX) mirroring the kernel numerics (bf16 MXU operands,
# f32 accumulation / epilogue).  Kernel additionally rounds the final result
# to bf16, hence the tolerance below.
# ----------------------------------------------------------------------------
def _ref_forward(x, m):
    bf = jnp.bfloat16
    h = jnp.dot(x.astype(bf), m.w1.astype(bf), preferred_element_type=jnp.float32)
    h = jnp.maximum(h + m.b1.astype(jnp.float32), 0.0)
    y = jnp.dot(h.astype(bf), m.w2.astype(bf), preferred_element_type=jnp.float32)
    return y + m.b2.astype(jnp.float32)


if __name__ == "__main__":
    key = jax.random.PRNGKey(0)
    k_param, k_x = jax.random.split(key)

    batch, in_dim, hidden_dim, out_dim = 16, 32, 32, 32
    inner = TinyMLP(k_param, in_dim, hidden_dim, out_dim)
    wrapped = ForwardOverrideModel(inner, "predict")

    x = jax.random.normal(k_x, (batch, in_dim), dtype=jnp.float32)

    y = wrapped(x)
    y = jax.block_until_ready(y)

    y_ref = _ref_forward(x, inner)
    assert y.shape == (batch, out_dim)
    assert y.dtype == jnp.bfloat16
    # bf16 output rounding dominates the error budget.
    assert jnp.allclose(y.astype(jnp.float32), y_ref, atol=2e-2, rtol=2e-2)

    print("KERNEL_OK")
</pallas_src>

<mosaic_0001>
module attributes {stable_mosaic.version = 11 : i64} {
  func.func @_mlp_kernel(%arg0: i32, %arg1: memref<16x32xf32, #tpu.memory_space<vmem>>, %arg2: memref<32x128xbf16, #tpu.memory_space<vmem>>, %arg3: memref<1x128xf32, #tpu.memory_space<vmem>>, %arg4: memref<128x128xbf16, #tpu.memory_space<vmem>>, %arg5: memref<1x128xf32, #tpu.memory_space<vmem>>, %arg6: memref<16x128xbf16, #tpu.memory_space<vmem>>) attributes {dimension_semantics = [#tpu.dimension_semantics<parallel>], iteration_bounds = array<i64: 1>, scalar_prefetch = 0 : i64, scratch_operands = 0 : i64, tpu.core_type = #tpu.core_type<tc>, window_params = [{transform_indices = @transform_0, window_bounds = array<i64: 16, 32>}, {pipeline_mode = #tpu.pipeline_mode<synchronous>, transform_indices = @transform_1, window_bounds = array<i64: 32, 128>}, {pipeline_mode = #tpu.pipeline_mode<synchronous>, transform_indices = @transform_2, window_bounds = array<i64: 1, 128>}, {pipeline_mode = #tpu.pipeline_mode<synchronous>, transform_indices = @transform_3, window_bounds = array<i64: 128, 128>}, {pipeline_mode = #tpu.pipeline_mode<synchronous>, transform_indices = @transform_4, window_bounds = array<i64: 1, 128>}, {transform_indices = @transform_5, window_bounds = array<i64: 16, 128>}]} {
    %c0 = arith.constant 0 : index
    %c0_0 = arith.constant 0 : index
    %0 = vector.load %arg1[%c0, %c0_0] : memref<16x32xf32, #tpu.memory_space<vmem>>, vector<16x32xf32>
    %1 = arith.truncf %0 : vector<16x32xf32> to vector<16x32xbf16>
    %c0_1 = arith.constant 0 : index
    %c0_2 = arith.constant 0 : index
    %2 = vector.load %arg3[%c0_1, %c0_2] : memref<1x128xf32, #tpu.memory_space<vmem>>, vector<1x128xf32>
    %c0_3 = arith.constant 0 : index
    %c0_4 = arith.constant 0 : index
    %3 = vector.load %arg5[%c0_3, %c0_4] : memref<1x128xf32, #tpu.memory_space<vmem>>, vector<1x128xf32>
    %c0_5 = arith.constant 0 : index
    %c0_6 = arith.constant 0 : index
    %4 = vector.load %arg2[%c0_5, %c0_6] : memref<32x128xbf16, #tpu.memory_space<vmem>>, vector<32x128xbf16>
    %cst = arith.constant dense<0.000000e+00> : vector<16x128xf32>
    %5 = tpu.matmul %1, %4, %cst {dimension_numbers = #tpu.dot_dimension_numbers<[1], [0], [0], [1], [0, 0, 1, 1], [], []>} : vector<16x32xbf16>, vector<32x128xbf16>, vector<16x128xf32> -> vector<16x128xf32>
    %6 = vector.broadcast %2 : vector<1x128xf32> to vector<16x128xf32>
    %7 = arith.addf %5, %6 : vector<16x128xf32>
    %cst_7 = arith.constant 0.000000e+00 : f32
    %8 = vector.broadcast %cst_7 : f32 to vector<16x128xf32>
    %9 = arith.maximumf %7, %8 : vector<16x128xf32>
    %10 = arith.truncf %9 : vector<16x128xf32> to vector<16x128xbf16>
    %c0_8 = arith.constant 0 : index
    %c0_9 = arith.constant 0 : index
    %11 = vector.load %arg4[%c0_8, %c0_9] : memref<128x128xbf16, #tpu.memory_space<vmem>>, vector<128x128xbf16>
    %cst_10 = arith.constant dense<0.000000e+00> : vector<16x128xf32>
    %12 = tpu.matmul %10, %11, %cst_10 {dimension_numbers = #tpu.dot_dimension_numbers<[1], [0], [0], [1], [0, 0, 1, 1], [], []>} : vector<16x128xbf16>, vector<128x128xbf16>, vector<16x128xf32> -> vector<16x128xf32>
    %13 = vector.broadcast %3 : vector<1x128xf32> to vector<16x128xf32>
    %14 = arith.addf %12, %13 : vector<16x128xf32>
    %15 = arith.truncf %14 : vector<16x128xf32> to vector<16x128xbf16>
    %c0_11 = arith.constant 0 : index
    %c0_12 = arith.constant 0 : index
    %16 = vector.load %arg6[%c0_11, %c0_12] : memref<16x128xbf16, #tpu.memory_space<vmem>>, vector<16x128xbf16>
    tpu.vector_store %arg6[%c0_11, %c0_12], %15 {strides = array<i32>} : memref<16x128xbf16, #tpu.memory_space<vmem>>, vector<16x128xbf16>,
    return
  }
  func.func @transform_0(%arg0: i32) -> (i32, i32) {
    %c0_i32 = arith.constant 0 : i32
    %c0_i32_0 = arith.constant 0 : i32
    return %arg0, %c0_i32 : i32, i32
  }
  func.func @transform_1(%arg0: i32) -> (i32, i32) {
    %c0_i32 = arith.constant 0 : i32
    %c0_i32_0 = arith.constant 0 : i32
    %c0_i32_1 = arith.constant 0 : i32
    return %c0_i32, %c0_i32_0 : i32, i32
  }
  func.func @transform_2(%arg0: i32) -> (i32, i32) {
    %c0_i32 = arith.constant 0 : i32
    %c0_i32_0 = arith.constant 0 : i32
    %c0_i32_1 = arith.constant 0 : i32
    return %c0_i32, %c0_i32_0 : i32, i32
  }
  func.func @transform_3(%arg0: i32) -> (i32, i32) {
    %c0_i32 = arith.constant 0 : i32
    %c0_i32_0 = arith.constant 0 : i32
    %c0_i32_1 = arith.constant 0 : i32
    return %c0_i32, %c0_i32_0 : i32, i32
  }
  func.func @transform_4(%arg0: i32) -> (i32, i32) {
    %c0_i32 = arith.constant 0 : i32
    %c0_i32_0 = arith.constant 0 : i32
    %c0_i32_1 = arith.constant 0 : i32
    return %c0_i32, %c0_i32_0 : i32, i32
  }
  func.func @transform_5(%arg0: i32) -> (i32, i32) {
    %c0_i32 = arith.constant 0 : i32
    %c0_i32_0 = arith.constant 0 : i32
    return %arg0, %c0_i32 : i32, i32
  }
}

</mosaic_0001>

<llo_original>
// kernel: mlp_forward.1
$region0: #{mlp_forward.1}
  #allocation0 [shape = 'u32[]', space=smem, size = 0x4, offset = 0x4, fixed_abs, tag = 'smem constant byte address 0x4 - core index']
  #allocation1 [shape = 'u32[144,128]{1,0:T(1,128)}', space=vmem, size = 0x12000, scoped, tag = 'internal scratch']
  %s0 = inlined_call_operand.hbm [shape: f32[16,32], index: 0, kind: input, shape index: {}]
  %s1 = inlined_call_operand.hbm [shape: bf16[32,128], index: 1, kind: input, shape index: {}]
  %s2 = inlined_call_operand.vmem [shape: f32[1,128], index: 2, kind: input, shape index: {}]
  %s3 = inlined_call_operand.hbm [shape: bf16[128,128], index: 3, kind: input, shape index: {}]
  %s4 = inlined_call_operand.vmem [shape: f32[1,128], index: 4, kind: input, shape index: {}]
  %s5 = inlined_call_operand.hbm [shape: bf16[16,128], index: 5, kind: output, shape index: {}]
  %s6 = sld [smem:[#allocation0]]
  $region42: #{mlp_forward.1} parent=0
    _
  %s8 = ssub.s32 1, %s6
  %s9 = scalar_select 0, %s8, %s6
  $region1: #{mlp_forward.1} parent=0
    #allocation2 [shape = 'u8[8192]{0}', space=vmem, size = 0x2000, scoped, tag = 'input window, operand 0, single buffered']
    #allocation3 [shape = 's32[1]{0}', space=sflag, size = 0x4, scoped, tag = 'scoped memory for mlp_forward.1']
    #allocation4 [shape = 's32[1]{0}', space=sflag, size = 0x4, scoped, tag = 'scoped memory for mlp_forward.1']
    #allocation5 [shape = 'u8[8192]{0}', space=vmem, size = 0x2000, scoped, tag = 'input window, operand 1, single buffered']
    #allocation6 [shape = 's32[1]{0}', space=sflag, size = 0x4, scoped, tag = 'scoped memory for mlp_forward.1']
    #allocation7 [shape = 'u8[32768]{0}', space=vmem, size = 0x8000, scoped, tag = 'input window, operand 3, single buffered']
    #allocation8 [shape = 'u8[4096]{0}', space=vmem, size = 0x1000, scoped, tag = 'output window, operand 0, single buffered']
    %10 = vsyncpa [#allocation3], 0
    %11 = vsyncpa [#allocation6], 0
    %12 = vsyncpa [#allocation4], 0
    // Predicated region
    $region2: #{mlp_forward.1} parent=1 // pred_check
      _
    $region3: #{mlp_forward.1} parent=1 // pred_check_branch
      %14 = sbr.rel (0) target = $region5
    $region4: #{mlp_forward.1} parent=1 // pred_region
      %s16 = ssub.s32 256, 256
      %17 = vsyncadd [#allocation3], %s16
      %s18 = sshll.u32 [#allocation2], 4
      %s19 = int_to_ptr.vmem [resolvable:$true] %s18
      %24 = dma.hbm_to_vmem [thread:$0]  %s0, 256, %s19, [#allocation3], 128, 128, 8
    $region5: #{mlp_forward.1} parent=1 // pred_fallthru
      _
    // Predicated region
    $region6: #{mlp_forward.1} parent=1 // pred_check
      _
    $region7: #{mlp_forward.1} parent=1 // pred_check_branch
      %26 = sbr.rel (0) target = $region9
    $region8: #{mlp_forward.1} parent=1 // pred_region
      %s28 = ssub.s32 256, 256
      %29 = vsyncadd [#allocation6], %s28
      %s30 = sshll.u32 [#allocation5], 4
      %s31 = int_to_ptr.vmem [resolvable:$true] %s30
      %36 = dma.hbm_to_vmem [thread:$0]  %s1, 256, %s31, [#allocation6], 64, 64, 4
    $region9: #{mlp_forward.1} parent=1 // pred_fallthru
      _
    // Predicated region
    $region10: #{mlp_forward.1} parent=1 // pred_check
      _
    $region11: #{mlp_forward.1} parent=1 // pred_check_branch
      %38 = sbr.rel (0) target = $region13
    $region12: #{mlp_forward.1} parent=1 // pred_region
      _
    $region13: #{mlp_forward.1} parent=1 // pred_fallthru
      _
    // Predicated region
    $region14: #{mlp_forward.1} parent=1 // pred_check
      _
    $region15: #{mlp_forward.1} parent=1 // pred_check_branch
      %40 = sbr.rel (0) target = $region17
    $region16: #{mlp_forward.1} parent=1 // pred_region
      %s42 = ssub.s32 1024, 1024
      %43 = vsyncadd [#allocation6], %s42
      %s44 = sshll.u32 [#allocation7], 4
      %s45 = int_to_ptr.vmem [resolvable:$true] %s44
      %50 = dma.hbm_to_vmem [thread:$0]  %s3, 1024, %s45, [#allocation6], 64, 64, 4
    $region17: #{mlp_forward.1} parent=1 // pred_fallthru
      _
    // Predicated region
    $region18: #{mlp_forward.1} parent=1 // pred_check
      _
    $region19: #{mlp_forward.1} parent=1 // pred_check_branch
      %52 = sbr.rel (0) target = $region21
    $region20: #{mlp_forward.1} parent=1 // pred_region
      _
    $region21: #{mlp_forward.1} parent=1 // pred_fallthru
      _
    // Predicated region
    $region22: #{mlp_forward.1} parent=1 // pred_check
      _
    $region23: #{mlp_forward.1} parent=1 // pred_check_branch
      %54 = sbr.rel (0) target = $region25
    $region24: #{mlp_forward.1} parent=1 // pred_region
      %55 = dma.done [#allocation3], 256
    $region25: #{mlp_forward.1} parent=1 // pred_fallthru
      _
    // Predicated region
    $region26: #{mlp_forward.1} parent=1 // pred_check
      _
    $region27: #{mlp_forward.1} parent=1 // pred_check_branch
      %57 = sbr.rel (0) target = $region29
    $region28: #{mlp_forward.1} parent=1 // pred_region
      %58 = dma.done [#allocation6], 256
    $region29: #{mlp_forward.1} parent=1 // pred_fallthru
      _
    // Predicated region
    $region30: #{mlp_forward.1} parent=1 // pred_check
      _
    $region31: #{mlp_forward.1} parent=1 // pred_check_branch
      %60 = sbr.rel (0) target = $region33
    $region32: #{mlp_forward.1} parent=1 // pred_region
      %61 = dma.done [#allocation6], 1024
    $region33: #{mlp_forward.1} parent=1 // pred_fallthru
      _
    %v63 = vld [vmem:[#allocation2] sm:$0xff]
    %v64 = vld [vmem:[#allocation2 + $0x8] sm:$0xff]
    %v65 = vpack.c.bf16 %v64, %v63
    %v66 = vld [vmem:[%s2] sm:$0x1]
    %v67 = vld [vmem:[%s4] sm:$0x1]
    %v68 = vld [vmem:[#allocation5] sm:$0xf]
    %v69 = vld [vmem:[#allocation5 + $0x4] sm:$0xf]
    %v70 = vld [vmem:[#allocation5 + $0x8] sm:$0xf]
    %v71 = vld [vmem:[#allocation5 + $0xc] sm:$0xf]
    %v73 = vlaneseq
    %v74 = vshrl.u32 %v73, 7
    %v75 = vsub.s32 0, %v74
    %v76 = vrot.slane %v66, %v75
    %v82 = vunpack.c.l.b16 %v68
    %v83 = vunpack.c.l.b16 %v69
    %v84 = vunpack.c.l.b16 %v70
    %v85 = vunpack.c.l.b16 %v71
    %v86 = vpack.c.b16 %v83, %v82
    %v87 = vpack.c.b16 %v85, %v84
    %vm90 = vcmask 261120
    %v92 = vsel %vm90, %v65, 0
    %94 = vmatprep.subr.bf16.mxu0 0
    %95 = vmatpush1.bf16.msra.mxu0 %v86
    %96 = vmatprep.subr.bf16.mxu0 0
    %97 = vmatpush1.bf16.msra.mxu0 %v87
    %98 = vmatprep.subr.bf16.mxu0 0
    %99 = vmatpush1.bf16.msra.mxu0 0
    %100 = vmatprep.subr.bf16.mxu0 0
    %101 = vmatpush1.bf16.msra.mxu0 0
    %102 = vmatprep.subr.bf16.mxu0 0
    %103 = vmatpush1.bf16.msra.mxu0 0
    %104 = vmatprep.subr.bf16.mxu0 0
    %105 = vmatpush1.bf16.msra.mxu0 0
    %106 = vmatprep.subr.bf16.mxu0 0
    %107 = vmatpush1.bf16.msra.mxu0 0
    %108 = vmatprep.subr.bf16.mxu0 0
    %109 = vmatpush1.bf16.msra.mxu0 0
    %110 = vmatprep.subr.bf16.mxu0 0
    %111 = vmatpush1.bf16.msra.mxu0 0
    %112 = vmatprep.subr.bf16.mxu0 0
    %113 = vmatpush1.bf16.msra.mxu0 0
    %114 = vmatprep.subr.bf16.mxu0 0
    %115 = vmatpush1.bf16.msra.mxu0 0
    %116 = vmatprep.subr.bf16.mxu0 0
    %117 = vmatpush1.bf16.msra.mxu0 0
    %118 = vmatprep.subr.bf16.mxu0 0
    %119 = vmatpush1.bf16.msra.mxu0 0
    %120 = vmatprep.subr.bf16.mxu0 0
    %121 = vmatpush1.bf16.msra.mxu0 0
    %122 = vmatprep.subr.bf16.mxu0 0
    %123 = vmatpush1.bf16.msra.mxu0 0
    %124 = vmatprep.subr.bf16.mxu0 0
    %125 = vmatpush1.bf16.msra.mxu0 0
    %126 = vmatprep.mubr.bf16.mxu0 0
    %127 = vmatmul.mubr.bf16.gmra.mrb[0].mxu0 %v92
    %v128 = vpop.f32.mrb[0].mxu0
    %v129 = vadd.f32 %v76, %v128
    %v130 = vpop.f32.mrb[0].mxu0
    %v131 = vpop.f32.mrb[0].mxu0
    %v132 = vadd.f32 %v76, %v131
    %v133 = vpop.f32.mrb[0].mxu0
    %134 = vdwg.mxu0
    %v135 = vmax.f32 %v129, 0.0
    %v136 = vmax.f32 %v132, 0.0
    %v137 = vpack.c.bf16 %v136, %v135
    %v138 = vld [vmem:[#allocation7] sm:$0xf]
    %v139 = vld [vmem:[#allocation7 + $0x4] sm:$0xf]
    %v140 = vld [vmem:[#allocation7 + $0x8] sm:$0xf]
    %v141 = vld [vmem:[#allocation7 + $0xc] sm:$0xf]
    %v142 = vld [vmem:[#allocation7 + $0x10] sm:$0xf]
    %v143 = vld [vmem:[#allocation7 + $0x14] sm:$0xf]
    %v144 = vld [vmem:[#allocation7 + $0x18] sm:$0xf]
    %v145 = vld [vmem:[#allocation7 + $0x1c] sm:$0xf]
    %v146 = vld [vmem:[#allocation7 + $0x20] sm:$0xf]
    %v147 = vld [vmem:[#allocation7 + $0x24] sm:$0xf]
    %v148 = vld [vmem:[#allocation7 + $0x28] sm:$0xf]
    %v149 = vld [vmem:[#allocation7 + $0x2c] sm:$0xf]
    %v150 = vld [vmem:[#allocation7 + $0x30] sm:$0xf]
    %v151 = vld [vmem:[#allocation7 + $0x34] sm:$0xf]
    %v152 = vld [vmem:[#allocation7 + $0x38] sm:$0xf]
    %v153 = vld [vmem:[#allocation7 + $0x3c] sm:$0xf]
    %v155 = vlaneseq
    %v156 = vshrl.u32 %v155, 7
    %v157 = vsub.s32 0, %v156
    %v158 = vrot.slane %v67, %v157
    %v176 = vunpack.c.l.b16 %v138
    %v177 = vunpack.c.l.b16 %v139
    %v178 = vunpack.c.l.b16 %v140
    %v179 = vunpack.c.l.b16 %v141
    %v180 = vunpack.c.l.b16 %v142
    %v181 = vunpack.c.l.b16 %v143
    %v182 = vunpack.c.l.b16 %v144
    %v183 = vunpack.c.l.b16 %v145
    %v184 = vunpack.c.l.b16 %v146
    %v185 = vunpack.c.l.b16 %v147
    %v186 = vunpack.c.l.b16 %v148
    %v187 = vunpack.c.l.b16 %v149
    %v188 = vunpack.c.l.b16 %v150
    %v189 = vunpack.c.l.b16 %v151
    %v190 = vunpack.c.l.b16 %v152
    %v191 = vunpack.c.l.b16 %v153
    %v192 = vpack.c.b16 %v177, %v176
    %v193 = vpack.c.b16 %v179, %v178
    %v194 = vpack.c.b16 %v181, %v180
    %v195 = vpack.c.b16 %v183, %v182
    %v196 = vpack.c.b16 %v185, %v184
    %v197 = vpack.c.b16 %v187, %v186
    %v198 = vpack.c.b16 %v189, %v188
    %v199 = vpack.c.b16 %v191, %v190
    %208 = vmatprep.subr.bf16.mxu0 0
    %209 = vmatpush1.bf16.msra.mxu0 %v192
    %210 = vmatprep.subr.bf16.mxu0 0
    %211 = vmatpush1.bf16.msra.mxu0 %v193
    %212 = vmatprep.subr.bf16.mxu0 0
    %213 = vmatpush1.bf16.msra.mxu0 %v194
    %214 = vmatprep.subr.bf16.mxu0 0
    %215 = vmatpush1.bf16.msra.mxu0 %v195
    %216 = vmatprep.subr.bf16.mxu0 0
    %217 = vmatpush1.bf16.msra.mxu0 %v196
    %218 = vmatprep.subr.bf16.mxu0 0
    %219 = vmatpush1.bf16.msra.mxu0 %v197
    %220 = vmatprep.subr.bf16.mxu0 0
    %221 = vmatpush1.bf16.msra.mxu0 %v198
    %222 = vmatprep.subr.bf16.mxu0 0
    %223 = vmatpush1.bf16.msra.mxu0 %v199
    %224 = vmatprep.subr.bf16.mxu0 0
    %225 = vmatpush1.bf16.msra.mxu0 0
    %226 = vmatprep.subr.bf16.mxu0 0
    %227 = vmatpush1.bf16.msra.mxu0 0
    %228 = vmatprep.subr.bf16.mxu0 0
    %229 = vmatpush1.bf16.msra.mxu0 0
    %230 = vmatprep.subr.bf16.mxu0 0
    %231 = vmatpush1.bf16.msra.mxu0 0
    %232 = vmatprep.subr.bf16.mxu0 0
    %233 = vmatpush1.bf16.msra.mxu0 0
    %234 = vmatprep.subr.bf16.mxu0 0
    %235 = vmatpush1.bf16.msra.mxu0 0
    %236 = vmatprep.subr.bf16.mxu0 0
    %237 = vmatpush1.bf16.msra.mxu0 0
    %238 = vmatprep.subr.bf16.mxu0 0
    %239 = vmatpush1.bf16.msra.mxu0 0
    %240 = vmatprep.mubr.bf16.mxu0 0
    %241 = vmatmul.mubr.bf16.gmra.mrb[0].mxu0 %v137
    %v242 = vpop.f32.mrb[0].mxu0
    %v243 = vadd.f32 %v158, %v242
    %v244 = vpop.f32.mrb[0].mxu0
    %v245 = vpop.f32.mrb[0].mxu0
    %v246 = vadd.f32 %v158, %v245
    %v247 = vpop.f32.mrb[0].mxu0
    %248 = vdwg.mxu0
    %v249 = vpack.c.bf16 %v246, %v243
    %v251 = vunpack.c.l.b16 %v249
    %v252 = vunpack.c.h.b16 %v249
    %v253 = vpack.c.b16 %v251, %v251
    %v254 = vpack.c.b16 %v252, %v252
    %257 = vst [vmem:[#allocation8] sm:$0xf] %v253
    %258 = vst [vmem:[#allocation8 + $0x4] sm:$0xf] %v254
    // Predicated region
    $region34: #{mlp_forward.1} parent=1 // pred_check
      _
    $region35: #{mlp_forward.1} parent=1 // pred_check_branch
      %260 = sbr.rel (0) target = $region37
    $region36: #{mlp_forward.1} parent=1 // pred_region
      %s262 = ssub.s32 128, 128
      %263 = vsyncadd [#allocation4], %s262
      %s264 = sshll.u32 [#allocation8], 4
      %s265 = int_to_ptr.vmem [resolvable:$true] %s264
      %270 = dma.vmem_to_hbm [thread:$0]  %s265, 128, %s5, [#allocation4], 64, 64, 4
    $region37: #{mlp_forward.1} parent=1 // pred_fallthru
      _
    // Predicated region
    $region38: #{mlp_forward.1} parent=1 // pred_check
      _
    $region39: #{mlp_forward.1} parent=1 // pred_check_branch
      %272 = sbr.rel (0) target = $region41
    $region40: #{mlp_forward.1} parent=1 // pred_region
      %273 = dma.done [#allocation4], 128
    $region41: #{mlp_forward.1} parent=1 // pred_fallthru
      _
    %274 = vsyncpa [#allocation3], 1
    %275 = vsyncpa [#allocation6], 1
    %276 = vsyncpa [#allocation4], 1

</llo_original>
